<compile_context>
chip_gen: v7x
topology: tpu7x:2x2x1
jax: 0.10.0
libtpu: 0.0.40
codegen_flags: <defaults>
</compile_context>

<pallas_src>
import functools

import jax
import jax.numpy as jnp
from jax.experimental import pallas as pl
from jax.experimental.pallas import tpu as pltpu

EPS = 1e-5


def _round_up(x, m):
    return ((x + m - 1) // m) * m


def _row_tile(n_rows, e, itemsize):
    """Pick a large, sublane-aligned row tile within a conservative VMEM budget."""
    budget_bytes = 4 * 1024 * 1024  # per x-tile buffer; 2x in + 2x out stays < 16 MiB
    tm = budget_bytes // max(1, e * itemsize)
    tm = max(8, min(1024, tm))
    tm = (tm // 8) * 8
    tm = min(tm, _round_up(n_rows, 8))
    return max(8, tm)


def _stats_kernel(x_ref, gamma_ref, beta_ref, scale_ref, shift_ref,
                  sum_ref, sumsq_ref, *, n_true):
    """Accumulate per-channel sum / sum^2; finalize fused scale/shift at the end."""
    i = pl.program_id(0)

    @pl.when(i == 0)
    def _():
        sum_ref[...] = jnp.zeros_like(sum_ref)
        sumsq_ref[...] = jnp.zeros_like(sumsq_ref)

    x = x_ref[...].astype(jnp.float32)                      # (TM, E)
    sum_ref[...] += jnp.sum(x, axis=0, keepdims=True)       # (1, E)
    sumsq_ref[...] += jnp.sum(x * x, axis=0, keepdims=True)  # (1, E)

    @pl.when(i == pl.num_programs(0) - 1)
    def _():
        inv_n = 1.0 / n_true                                 # true N, not padded
        mean = sum_ref[...] * inv_n
        var = sumsq_ref[...] * inv_n - mean * mean           # biased var (PyTorch fwd)
        var = jnp.maximum(var, 0.0)                          # guard fp cancellation
        inv_std = jax.lax.rsqrt(var + EPS)
        scale = gamma_ref[...].astype(jnp.float32) * inv_std
        shift = beta_ref[...].astype(jnp.float32) - mean * scale
        scale_ref[...] = scale
        shift_ref[...] = shift


def _apply_kernel(x_ref, scale_ref, shift_ref, o_ref):
    """y = x * scale + shift (single fused multiply-add per element)."""
    o_ref[...] = (x_ref[...] * scale_ref[...] + shift_ref[...]).astype(o_ref.dtype)


def batchnorm_forward(x, gamma, beta):
    """x: (B, L, E); gamma, beta: (E,). Returns (B, L, E)."""
    B, L, E = x.shape
    N = B * L
    xf = x.reshape(N, E)

    itemsize = jnp.dtype(x.dtype).itemsize
    TM = _row_tile(N, E, itemsize)
    n_pad = _round_up(N, TM)
    if n_pad != N:
        # Zero rows add nothing to sum/sumsq; stats divide by the true N.
        xf = jnp.pad(xf, ((0, n_pad - N), (0, 0)))
    num_tiles = n_pad // TM

    gamma2 = gamma.reshape(1, E).astype(jnp.float32)
    beta2 = beta.reshape(1, E).astype(jnp.float32)

    # --- Pass 1: per-channel stats -> fused (scale, shift), both (1, E) f32 ---
    scale, shift = pl.pallas_call(
        functools.partial(_stats_kernel, n_true=float(N)),
        out_shape=(jax.ShapeDtypeStruct((1, E), jnp.float32),
                   jax.ShapeDtypeStruct((1, E), jnp.float32)),
        grid_spec=pltpu.PrefetchScalarGridSpec(
            num_scalar_prefetch=0,
            grid=(num_tiles,),
            in_specs=[
                pl.BlockSpec((TM, E), lambda i: (i, 0)),
                pl.BlockSpec((1, E), lambda i: (0, 0)),
                pl.BlockSpec((1, E), lambda i: (0, 0)),
            ],
            out_specs=(
                pl.BlockSpec((1, E), lambda i: (0, 0)),
                pl.BlockSpec((1, E), lambda i: (0, 0)),
            ),
            scratch_shapes=[
                pltpu.VMEM((1, E), jnp.float32),   # running sum
                pltpu.VMEM((1, E), jnp.float32),   # running sum of squares
            ],
        ),
        compiler_params=pltpu.CompilerParams(
            dimension_semantics=("arbitrary",),     # reduction axis
        ),
    )(xf, gamma2, beta2)

    # --- Pass 2: y = x * scale + shift, embarrassingly parallel over row tiles ---
    out = pl.pallas_call(
        _apply_kernel,
        out_shape=jax.ShapeDtypeStruct((n_pad, E), x.dtype),
        grid_spec=pltpu.PrefetchScalarGridSpec(
            num_scalar_prefetch=0,
            grid=(num_tiles,),
            in_specs=[
                pl.BlockSpec((TM, E), lambda i: (i, 0)),
                pl.BlockSpec((1, E), lambda i: (0, 0)),
                pl.BlockSpec((1, E), lambda i: (0, 0)),
            ],
            out_specs=pl.BlockSpec((TM, E), lambda i: (i, 0)),
        ),
        compiler_params=pltpu.CompilerParams(
            dimension_semantics=("parallel",),      # megacore-shardable on v7x
        ),
    )(xf, scale, shift)

    return out[:N].reshape(B, L, E)


if __name__ == "__main__":
    key = jax.random.PRNGKey(0)
    B, L, E = 2, 8, 32  # batch, sequence length, embedding size

    x = jax.random.normal(key, (B, L, E), dtype=jnp.float32)

    # nn.BatchNorm1d default affine init: gamma=1, beta=0.
    gamma = jnp.ones((E,), dtype=jnp.float32)
    beta = jnp.zeros((E,), dtype=jnp.float32)

    y = batchnorm_forward(x, gamma, beta)
    y = jax.block_until_ready(y)

    # Pure-JAX reference (same math as PyTorch training-mode forward).
    mean = jnp.mean(x, axis=(0, 1), keepdims=True)
    var = jnp.mean((x - mean) ** 2, axis=(0, 1), keepdims=True)
    ref = (x - mean) / jnp.sqrt(var + EPS) * gamma + beta
    assert jnp.allclose(y, ref, atol=1e-5, rtol=1e-5), "mismatch vs reference"

    print("KERNEL_OK")
</pallas_src>

<mosaic_0001>
module attributes {stable_mosaic.version = 11 : i64} {
  func.func @_stats_kernel(%arg0: i32, %arg1: memref<16x32xf32, #tpu.memory_space<vmem>>, %arg2: memref<1x32xf32, #tpu.memory_space<vmem>>, %arg3: memref<1x32xf32, #tpu.memory_space<vmem>>, %arg4: memref<1x32xf32, #tpu.memory_space<vmem>>, %arg5: memref<1x32xf32, #tpu.memory_space<vmem>>, %arg6: memref<1x32xf32, #tpu.memory_space<vmem>>, %arg7: memref<1x32xf32, #tpu.memory_space<vmem>>) attributes {dimension_semantics = [#tpu.dimension_semantics<arbitrary>], iteration_bounds = array<i64: 1>, scalar_prefetch = 0 : i64, scratch_operands = 2 : i64, tpu.core_type = #tpu.core_type<tc>, window_params = [{transform_indices = @transform_0, window_bounds = array<i64: 16, 32>}, {pipeline_mode = #tpu.pipeline_mode<synchronous>, transform_indices = @transform_1, window_bounds = array<i64: 1, 32>}, {pipeline_mode = #tpu.pipeline_mode<synchronous>, transform_indices = @transform_2, window_bounds = array<i64: 1, 32>}, {pipeline_mode = #tpu.pipeline_mode<synchronous>, transform_indices = @transform_3, window_bounds = array<i64: 1, 32>}, {pipeline_mode = #tpu.pipeline_mode<synchronous>, transform_indices = @transform_4, window_bounds = array<i64: 1, 32>}]} {
    %c0_i32 = arith.constant 0 : i32
    %0 = arith.cmpi eq, %arg0, %c0_i32 : i32
    %1 = arith.extui %0 : i1 to i32
    %c0_i32_0 = arith.constant 0 : i32
    %2 = arith.cmpi ne, %1, %c0_i32_0 : i32
    scf.if %2 {
      %cst_13 = arith.constant 0.000000e+00 : f32
      %18 = vector.broadcast %cst_13 : f32 to vector<1x32xf32>
      %c0_14 = arith.constant 0 : index
      %c0_15 = arith.constant 0 : index
      %19 = vector.load %arg6[%c0_14, %c0_15] : memref<1x32xf32, #tpu.memory_space<vmem>>, vector<1x32xf32>
      tpu.vector_store %arg6[%c0_14, %c0_15], %18 {strides = array<i32>} : memref<1x32xf32, #tpu.memory_space<vmem>>, vector<1x32xf32>,
      %cst_16 = arith.constant 0.000000e+00 : f32
      %20 = vector.broadcast %cst_16 : f32 to vector<1x32xf32>
      %c0_17 = arith.constant 0 : index
      %c0_18 = arith.constant 0 : index
      %21 = vector.load %arg7[%c0_17, %c0_18] : memref<1x32xf32, #tpu.memory_space<vmem>>, vector<1x32xf32>
      tpu.vector_store %arg7[%c0_17, %c0_18], %20 {strides = array<i32>} : memref<1x32xf32, #tpu.memory_space<vmem>>, vector<1x32xf32>,
    } else {
    }
    %c0 = arith.constant 0 : index
    %c0_1 = arith.constant 0 : index
    %3 = vector.load %arg1[%c0, %c0_1] : memref<16x32xf32, #tpu.memory_space<vmem>>, vector<16x32xf32>
    %c0_2 = arith.constant 0 : index
    %c0_3 = arith.constant 0 : index
    %4 = vector.load %arg6[%c0_2, %c0_3] : memref<1x32xf32, #tpu.memory_space<vmem>>, vector<1x32xf32>
    %cst = arith.constant dense<0.000000e+00> : vector<32xf32>
    %5 = vector.multi_reduction <add>, %3, %cst [0] : vector<16x32xf32> to vector<32xf32>
    %6 = vector.shape_cast %5 : vector<32xf32> to vector<1x32xf32>
    %7 = arith.addf %4, %6 : vector<1x32xf32>
    %c0_4 = arith.constant 0 : index
    %c0_5 = arith.constant 0 : index
    %8 = vector.load %arg6[%c0_4, %c0_5] : memref<1x32xf32, #tpu.memory_space<vmem>>, vector<1x32xf32>
    tpu.vector_store %arg6[%c0_4, %c0_5], %7 {strides = array<i32>} : memref<1x32xf32, #tpu.memory_space<vmem>>, vector<1x32xf32>,
    %c0_6 = arith.constant 0 : index
    %c0_7 = arith.constant 0 : index
    %9 = vector.load %arg7[%c0_6, %c0_7] : memref<1x32xf32, #tpu.memory_space<vmem>>, vector<1x32xf32>
    %10 = arith.mulf %3, %3 : vector<16x32xf32>
    %cst_8 = arith.constant dense<0.000000e+00> : vector<32xf32>
    %11 = vector.multi_reduction <add>, %10, %cst_8 [0] : vector<16x32xf32> to vector<32xf32>
    %12 = vector.shape_cast %11 : vector<32xf32> to vector<1x32xf32>
    %13 = arith.addf %9, %12 : vector<1x32xf32>
    %c0_9 = arith.constant 0 : index
    %c0_10 = arith.constant 0 : index
    %14 = vector.load %arg7[%c0_9, %c0_10] : memref<1x32xf32, #tpu.memory_space<vmem>>, vector<1x32xf32>
    tpu.vector_store %arg7[%c0_9, %c0_10], %13 {strides = array<i32>} : memref<1x32xf32, #tpu.memory_space<vmem>>, vector<1x32xf32>,
    %c0_i32_11 = arith.constant 0 : i32
    %15 = arith.cmpi eq, %arg0, %c0_i32_11 : i32
    %16 = arith.extui %15 : i1 to i32
    %c0_i32_12 = arith.constant 0 : i32
    %17 = arith.cmpi ne, %16, %c0_i32_12 : i32
    scf.if %17 {
      %c0_13 = arith.constant 0 : index
      %c0_14 = arith.constant 0 : index
      %18 = vector.load %arg6[%c0_13, %c0_14] : memref<1x32xf32, #tpu.memory_space<vmem>>, vector<1x32xf32>
      %cst_15 = arith.constant 6.250000e-02 : f32
      %19 = vector.broadcast %cst_15 : f32 to vector<1x32xf32>
      %20 = arith.mulf %18, %19 : vector<1x32xf32>
      %c0_16 = arith.constant 0 : index
      %c0_17 = arith.constant 0 : index
      %21 = vector.load %arg7[%c0_16, %c0_17] : memref<1x32xf32, #tpu.memory_space<vmem>>, vector<1x32xf32>
      %cst_18 = arith.constant 6.250000e-02 : f32
      %22 = vector.broadcast %cst_18 : f32 to vector<1x32xf32>
      %23 = arith.mulf %21, %22 : vector<1x32xf32>
      %24 = arith.mulf %20, %20 : vector<1x32xf32>
      %25 = arith.subf %23, %24 : vector<1x32xf32>
      %cst_19 = arith.constant 0.000000e+00 : f32
      %26 = vector.broadcast %cst_19 : f32 to vector<1x32xf32>
      %27 = arith.maximumf %25, %26 : vector<1x32xf32>
      %cst_20 = arith.constant 9.99999974E-6 : f32
      %28 = vector.broadcast %cst_20 : f32 to vector<1x32xf32>
      %29 = arith.addf %27, %28 : vector<1x32xf32>
      %30 = math.rsqrt %29 : vector<1x32xf32>
      %c0_21 = arith.constant 0 : index
      %c0_22 = arith.constant 0 : index
      %31 = vector.load %arg2[%c0_21, %c0_22] : memref<1x32xf32, #tpu.memory_space<vmem>>, vector<1x32xf32>
      %32 = arith.mulf %31, %30 : vector<1x32xf32>
      %c0_23 = arith.constant 0 : index
      %c0_24 = arith.constant 0 : index
      %33 = vector.load %arg3[%c0_23, %c0_24] : memref<1x32xf32, #tpu.memory_space<vmem>>, vector<1x32xf32>
      %34 = arith.mulf %20, %32 : vector<1x32xf32>
      %35 = arith.subf %33, %34 : vector<1x32xf32>
      %c0_25 = arith.constant 0 : index
      %c0_26 = arith.constant 0 : index
      %36 = vector.load %arg4[%c0_25, %c0_26] : memref<1x32xf32, #tpu.memory_space<vmem>>, vector<1x32xf32>
      tpu.vector_store %arg4[%c0_25, %c0_26], %32 {strides = array<i32>} : memref<1x32xf32, #tpu.memory_space<vmem>>, vector<1x32xf32>,
      %c0_27 = arith.constant 0 : index
      %c0_28 = arith.constant 0 : index
      %37 = vector.load %arg5[%c0_27, %c0_28] : memref<1x32xf32, #tpu.memory_space<vmem>>, vector<1x32xf32>
      tpu.vector_store %arg5[%c0_27, %c0_28], %35 {strides = array<i32>} : memref<1x32xf32, #tpu.memory_space<vmem>>, vector<1x32xf32>,
    } else {
    }
    return
  }
  func.func @transform_0(%arg0: i32) -> (i32, i32) {
    %c0_i32 = arith.constant 0 : i32
    %c0_i32_0 = arith.constant 0 : i32
    return %arg0, %c0_i32 : i32, i32
  }
  func.func @transform_1(%arg0: i32) -> (i32, i32) {
    %c0_i32 = arith.constant 0 : i32
    %c0_i32_0 = arith.constant 0 : i32
    %c0_i32_1 = arith.constant 0 : i32
    return %c0_i32, %c0_i32_0 : i32, i32
  }
  func.func @transform_2(%arg0: i32) -> (i32, i32) {
    %c0_i32 = arith.constant 0 : i32
    %c0_i32_0 = arith.constant 0 : i32
    %c0_i32_1 = arith.constant 0 : i32
    return %c0_i32, %c0_i32_0 : i32, i32
  }
  func.func @transform_3(%arg0: i32) -> (i32, i32) {
    %c0_i32 = arith.constant 0 : i32
    %c0_i32_0 = arith.constant 0 : i32
    %c0_i32_1 = arith.constant 0 : i32
    return %c0_i32, %c0_i32_0 : i32, i32
  }
  func.func @transform_4(%arg0: i32) -> (i32, i32) {
    %c0_i32 = arith.constant 0 : i32
    %c0_i32_0 = arith.constant 0 : i32
    %c0_i32_1 = arith.constant 0 : i32
    return %c0_i32, %c0_i32_0 : i32, i32
  }
}

</mosaic_0001>

<llo_original>
// kernel: tpu_custom_call.1
$region0: #{tpu_custom_call.1}
  #allocation0 [shape = 'u32[]', space=smem, size = 0x4, offset = 0x4, fixed_abs, tag = 'smem constant byte address 0x4 - core index']
  #allocation1 [shape = 'u32[144,128]{1,0:T(1,128)}', space=vmem, size = 0x12000, scoped, tag = 'internal scratch']
  #allocation2 [shape = 'f32[1,32]{1,0:T(1,128)}', space=vmem, size = 0x200, scoped, tag = 'scratch operand']
  #allocation3 [shape = 'f32[1,32]{1,0:T(1,128)}', space=vmem, size = 0x200, scoped, tag = 'scratch operand']
  %s0 = inlined_call_operand.hbm [shape: f32[16,32], index: 0, kind: input, shape index: {}]
  %s1 = inlined_call_operand.vmem [shape: f32[1,32], index: 1, kind: input, shape index: {}]
  %s2 = inlined_call_operand.vmem [shape: f32[1,32], index: 2, kind: input, shape index: {}]
  %s3 = inlined_call_operand.hbm [shape: f32[1,32], index: 3, kind: output, shape index: {0}]
  %s4 = inlined_call_operand.hbm [shape: f32[1,32], index: 4, kind: output, shape index: {1}]
  %5 = xla_tuple %s3, %s4
  %s6 = sld [smem:[#allocation0]]
  $region42: #{tpu_custom_call.1} parent=0
    _
  %s8 = ssub.s32 1, %s6
  %s9 = scalar_select 0, %s8, %s6
  $region1: #{tpu_custom_call.1} parent=0
    #allocation4 [shape = 'u8[8192]{0}', space=vmem, size = 0x2000, scoped, tag = 'input window, operand 0, single buffered']
    #allocation5 [shape = 's32[1]{0}', space=sflag, size = 0x4, scoped, tag = 'scoped memory for tpu_custom_call.1']
    #allocation6 [shape = 's32[1]{0}', space=sflag, size = 0x4, scoped, tag = 'scoped memory for tpu_custom_call.1']
    #allocation7 [shape = 'u8[512]{0}', space=vmem, size = 0x400, scoped, tag = 'output window, operand 0, single buffered']
    #allocation8 [shape = 'u8[512]{0}', space=vmem, size = 0x400, scoped, tag = 'output window, operand 1, single buffered']
    #allocation9 [shape = 's32[1]{0}', space=sflag, size = 0x4, scoped, tag = 'scoped memory for tpu_custom_call.1']
    %10 = vsyncpa [#allocation5], 0
    %11 = vsyncpa [#allocation6], 0
    %12 = vsyncpa [#allocation9], 0
    // Predicated region
    $region2: #{tpu_custom_call.1} parent=1 // pred_check
      _
    $region3: #{tpu_custom_call.1} parent=1 // pred_check_branch
      %14 = sbr.rel (0) target = $region5
    $region4: #{tpu_custom_call.1} parent=1 // pred_region
      %s16 = ssub.s32 256, 256
      %17 = vsyncadd [#allocation5], %s16
      %s18 = sshll.u32 [#allocation4], 4
      %s19 = int_to_ptr.vmem [resolvable:$true] %s18
      %24 = dma.hbm_to_vmem [thread:$0]  %s0, 256, %s19, [#allocation5], 128, 128, 8
    $region5: #{tpu_custom_call.1} parent=1 // pred_fallthru
      _
    // Predicated region
    $region6: #{tpu_custom_call.1} parent=1 // pred_check
      _
    $region7: #{tpu_custom_call.1} parent=1 // pred_check_branch
      %26 = sbr.rel (0) target = $region9
    $region8: #{tpu_custom_call.1} parent=1 // pred_region
      _
    $region9: #{tpu_custom_call.1} parent=1 // pred_fallthru
      _
    // Predicated region
    $region10: #{tpu_custom_call.1} parent=1 // pred_check
      _
    $region11: #{tpu_custom_call.1} parent=1 // pred_check_branch
      %28 = sbr.rel (0) target = $region13
    $region12: #{tpu_custom_call.1} parent=1 // pred_region
      _
    $region13: #{tpu_custom_call.1} parent=1 // pred_fallthru
      _
    // Predicated region
    $region14: #{tpu_custom_call.1} parent=1 // pred_check
      _
    $region15: #{tpu_custom_call.1} parent=1 // pred_check_branch
      %30 = sbr.rel (0) target = $region17
    $region16: #{tpu_custom_call.1} parent=1 // pred_region
      %31 = dma.done [#allocation5], 256
    $region17: #{tpu_custom_call.1} parent=1 // pred_fallthru
      _
    %p32 = scmp.eq.s32.totalorder 0, 0
    // Predicated region
    $region18: #{tpu_custom_call.1} parent=1 // pred_check
      %p33 = pneg %p32
    $region19: #{tpu_custom_call.1} parent=1 // pred_check_branch
      %35 = sbr.rel (%p33) target = $region21
    $region20: #{tpu_custom_call.1} parent=1 // pred_region
      %vm36 = vcmask 253952
      %37 = vst.msk [vmem:[#allocation2] sm:$0x1] %vm36, 0.0
      %38 = vst.msk [vmem:[#allocation3] sm:$0x1] %vm36, 0.0
    $region21: #{tpu_custom_call.1} parent=1 // pred_fallthru
      _
    %v39 = vld [vmem:[#allocation4] sm:$0xff]
    %v40 = vld [vmem:[#allocation4 + $0x8] sm:$0xff]
    %v41 = vld [vmem:[#allocation2] sm:$0x1]
    %vm42 = vcmask 261120
    %v43 = vsel %vm42, %v39, 0.0
    %v44 = vsel %vm42, %v40, 0.0
    %v45 = vadd.f32 %v43, %v44
    %v46 = vrot.slane %v45, 4
    %v47 = vadd.f32 %v45, %v46
    %v48 = vrot.slane %v47, 2
    %v49 = vadd.f32 %v47, %v48
    %v50 = vrot.slane %v49, 1
    %v51 = vadd.f32 %v49, %v50
    %v52 = vadd.f32 %v41, %v51
    %vm53 = vcmask 253952
    %54 = vst.msk [vmem:[#allocation2] sm:$0x1] %vm53, %v52
    %v55 = vld [vmem:[#allocation3] sm:$0x1]
    %v56 = vmul.f32 %v39, %v39
    %v57 = vmul.f32 %v40, %v40
    %v58 = vsel %vm42, %v56, 0.0
    %v59 = vsel %vm42, %v57, 0.0
    %v60 = vadd.f32 %v58, %v59
    %v61 = vrot.slane %v60, 4
    %v62 = vadd.f32 %v60, %v61
    %v63 = vrot.slane %v62, 2
    %v64 = vadd.f32 %v62, %v63
    %v65 = vrot.slane %v64, 1
    %v66 = vadd.f32 %v64, %v65
    %v67 = vadd.f32 %v55, %v66
    %68 = vst.msk [vmem:[#allocation3] sm:$0x1] %vm53, %v67
    // Predicated region
    $region22: #{tpu_custom_call.1} parent=1 // pred_check
      %p69 = pneg %p32
    $region23: #{tpu_custom_call.1} parent=1 // pred_check_branch
      %71 = sbr.rel (%p69) target = $region25
    $region24: #{tpu_custom_call.1} parent=1 // pred_region
      %v72 = vld [vmem:[#allocation2] sm:$0x1]
      %v73 = vmul.f32 %v72, 0.0625
      %v74 = vld [vmem:[#allocation3] sm:$0x1]
      %v75 = vmul.f32 %v74, 0.0625
      %v76 = vmul.f32 %v73, %v73
      %v77 = vsub.f32 %v75, %v76
      %v78 = vmax.f32 %v77, 0.0
      %v79 = vadd.f32 %v78, 1e-05
      %v80 = vrsqrt.pop %v79
      %v81 = vld [vmem:[%s1] sm:$0x1]
      %v82 = vmul.f32 %v81, %v80
      %v83 = vld [vmem:[%s2] sm:$0x1]
      %v84 = vmul.f32 %v73, %v82
      %v85 = vsub.f32 %v83, %v84
      %86 = vst.msk [vmem:[#allocation7] sm:$0x1] %vm53, %v82
      %87 = vst.msk [vmem:[#allocation8] sm:$0x1] %vm53, %v85
    $region25: #{tpu_custom_call.1} parent=1 // pred_fallthru
      _
    // Predicated region
    $region26: #{tpu_custom_call.1} parent=1 // pred_check
      _
    $region27: #{tpu_custom_call.1} parent=1 // pred_check_branch
      %89 = sbr.rel (0) target = $region29
    $region28: #{tpu_custom_call.1} parent=1 // pred_region
      %s91 = ssub.s32 16, 16
      %92 = vsyncadd [#allocation6], %s91
      %s94 = sshll.u32 [#allocation7], 4
      %s95 = int_to_ptr.vmem [resolvable:$true] %s94
      %97 = dma.vmem_to_hbm [thread:$0]  %s95, 16, %s3, [#allocation6]
    $region29: #{tpu_custom_call.1} parent=1 // pred_fallthru
      _
    // Predicated region
    $region30: #{tpu_custom_call.1} parent=1 // pred_check
      _
    $region31: #{tpu_custom_call.1} parent=1 // pred_check_branch
      %99 = sbr.rel (0) target = $region33
    $region32: #{tpu_custom_call.1} parent=1 // pred_region
      %s101 = ssub.s32 16, 16
      %102 = vsyncadd [#allocation9], %s101
      %s104 = sshll.u32 [#allocation8], 4
      %s105 = int_to_ptr.vmem [resolvable:$true] %s104
      %107 = dma.vmem_to_hbm [thread:$0]  %s105, 16, %s4, [#allocation9]
    $region33: #{tpu_custom_call.1} parent=1 // pred_fallthru
      _
    // Predicated region
    $region34: #{tpu_custom_call.1} parent=1 // pred_check
      _
    $region35: #{tpu_custom_call.1} parent=1 // pred_check_branch
      %109 = sbr.rel (0) target = $region37
    $region36: #{tpu_custom_call.1} parent=1 // pred_region
      %110 = dma.done [#allocation6], 16
    $region37: #{tpu_custom_call.1} parent=1 // pred_fallthru
      _
    // Predicated region
    $region38: #{tpu_custom_call.1} parent=1 // pred_check
      _
    $region39: #{tpu_custom_call.1} parent=1 // pred_check_branch
      %112 = sbr.rel (0) target = $region41
    $region40: #{tpu_custom_call.1} parent=1 // pred_region
      %113 = dma.done [#allocation9], 16
    $region41: #{tpu_custom_call.1} parent=1 // pred_fallthru
      _
    %114 = vsyncpa [#allocation5], 1
    %115 = vsyncpa [#allocation6], 1
    %116 = vsyncpa [#allocation9], 1

</llo_original>
